<compile_context>
chip_gen: v5e
topology: v5e:2x2
jax: 0.10.0
libtpu: 0.0.40
codegen_flags: <defaults>
</compile_context>

<pallas_src>
import functools

import jax
import jax.numpy as jnp
from jax.experimental import pallas as pl
from jax.experimental.pallas import tpu as pltpu


def _conv1x1_kernel(x_ref, w_ref, b_ref, o_ref):
    # x_ref: (1, C, t_hw)   w_ref: (O, C)   b_ref: (O, 1)   o_ref: (1, O, t_hw)
    x = x_ref[0]                                                   # (C, t_hw)
    acc = jnp.dot(w_ref[...], x, preferred_element_type=jnp.float32)  # (O, t_hw) f32
    o_ref[0] = (acc + b_ref[...].astype(jnp.float32)).astype(o_ref.dtype)


def landmark_head_forward(x_nchw, weight, bias, num_anchors=3, t_hw=512,
                          compute_dtype=None):
    """LandmarkHead forward.

    x_nchw: (N, C, H, W)   weight: (O, C) with O = num_anchors*8 (conv1x1 weight
    (O, C, 1, 1) squeezed)   bias: (O,).
    Returns (N, H*W*num_anchors, 8), identical to the PyTorch module.

    t_hw: lane tile over the flattened spatial dim (multiple of 128; cap ~2048 on
          v5e for large C to stay inside the default scoped-VMEM limit).
    compute_dtype: optionally cast x/W (e.g. jnp.bfloat16 on v6e/v7x) for the MXU;
          accumulation and bias-add stay f32.
    """
    N, C, H, W = x_nchw.shape
    O = weight.shape[0]
    assert O == num_anchors * 8
    HW = H * W
    out_dtype = x_nchw.dtype

    # ---- pick a lane tile (multiple of 128 when possible) and pad the tail ----
    t = min(int(t_hw), HW)
    if HW > 128:
        t = max(128, (t // 128) * 128)
    n_hw_tiles = pl.cdiv(HW, t)
    HW_pad = n_hw_tiles * t

    x3 = x_nchw.reshape(N, C, HW)              # free: NCHW is already (N, C, H*W)
    if HW_pad != HW:
        x3 = jnp.pad(x3, ((0, 0), (0, 0), (0, HW_pad - HW)))

    if compute_dtype is not None:
        x3 = x3.astype(compute_dtype)
        w = weight.astype(compute_dtype)
    else:
        w = weight
    b2d = bias.astype(jnp.float32).reshape(O, 1)

    itemsize = jnp.dtype(x3.dtype).itemsize
    cost = pl.CostEstimate(
        flops=2 * N * HW_pad * C * O,
        transcendentals=0,
        bytes_accessed=(N * C * HW_pad * itemsize            # x read
                        + C * O * itemsize                    # W read
                        + N * O * HW_pad * jnp.dtype(out_dtype).itemsize),  # out write
    )

    out3 = pl.pallas_call(
        _conv1x1_kernel,
        out_shape=jax.ShapeDtypeStruct((N, O, HW_pad), out_dtype),
        grid_spec=pltpu.PrefetchScalarGridSpec(
            num_scalar_prefetch=0,
            grid=(N, n_hw_tiles),
            in_specs=[
                pl.BlockSpec((1, C, t), lambda n, j: (n, 0, j)),   # x: lane-dense
                pl.BlockSpec((O, C), lambda n, j: (0, 0)),         # W: resident
                pl.BlockSpec((O, 1), lambda n, j: (0, 0)),         # bias
            ],
            out_specs=pl.BlockSpec((1, O, t), lambda n, j: (n, 0, j)),  # lane-dense
        ),
        compiler_params=pltpu.CompilerParams(
            dimension_semantics=("parallel", "parallel")),
        cost_estimate=cost,
    )(x3, w, b2d)

    # (N, O, HW_pad) -> drop pad -> (N, HW, O) -> (N, H*W*A, 8)
    out3 = out3[:, :, :HW]
    out = jnp.transpose(out3, (0, 2, 1))       # == permute(0, 2, 3, 1) after flatten
    return out.reshape(N, HW * num_anchors, 8)


def _reference(x_nchw, weight, bias, num_anchors=3):
    # pure-JAX reference for correctness check (matches the PyTorch module)
    N, C, H, W = x_nchw.shape
    out = jnp.einsum("nchw,oc->nohw", x_nchw, weight) + bias[None, :, None, None]
    out = jnp.transpose(out, (0, 2, 3, 1))
    return out.reshape(N, -1, 8)


if __name__ == "__main__":
    key = jax.random.PRNGKey(0)
    k_x, k_w, k_b = jax.random.split(key, 3)

    # small shapes consistent with the module (inchannels scaled down)
    N, C, H, W = 2, 32, 16, 16
    num_anchors = 3
    O = num_anchors * 8

    x = jax.random.normal(k_x, (N, C, H, W), dtype=jnp.float32)
    weight = jax.random.normal(k_w, (O, C), dtype=jnp.float32) * 0.05  # (O,C,1,1) squeezed
    bias = jax.random.normal(k_b, (O,), dtype=jnp.float32) * 0.01

    out = landmark_head_forward(x, weight, bias, num_anchors=num_anchors)
    out = jax.block_until_ready(out)

    ref = _reference(x, weight, bias, num_anchors=num_anchors)
    assert out.shape == (N, H * W * num_anchors, 8), out.shape
    assert jnp.allclose(out, ref, atol=1e-4, rtol=1e-4), "mismatch vs reference"

    # also exercise the tail-handling path (HW not a multiple of the lane tile)
    x_odd = jax.random.normal(k_x, (N, C, 10, 15), dtype=jnp.float32)
    out_odd = jax.block_until_ready(
        landmark_head_forward(x_odd, weight, bias, num_anchors=num_anchors, t_hw=128))
    ref_odd = _reference(x_odd, weight, bias, num_anchors=num_anchors)
    assert out_odd.shape == (N, 10 * 15 * num_anchors, 8), out_odd.shape
    assert jnp.allclose(out_odd, ref_odd, atol=1e-4, rtol=1e-4), "tail mismatch"

    print("KERNEL_OK")
</pallas_src>

<mosaic_0001>
module attributes {stable_mosaic.version = 11 : i64} {
  func.func @_conv1x1_kernel(%arg0: i32, %arg1: i32, %arg2: memref<1x32x256xf32, #tpu.memory_space<vmem>>, %arg3: memref<24x32xf32, #tpu.memory_space<vmem>>, %arg4: memref<24x1xf32, #tpu.memory_space<vmem>>, %arg5: memref<1x24x256xf32, #tpu.memory_space<vmem>>) attributes {dimension_semantics = [#tpu.dimension_semantics<parallel>, #tpu.dimension_semantics<parallel>], iteration_bounds = array<i64: 2, 1>, scalar_prefetch = 0 : i64, scratch_operands = 0 : i64, tpu.core_type = #tpu.core_type<tc>, window_params = [{transform_indices = @transform_0, window_bounds = array<i64: 1, 32, 256>}, {pipeline_mode = #tpu.pipeline_mode<synchronous>, transform_indices = @transform_1, window_bounds = array<i64: 24, 32>}, {pipeline_mode = #tpu.pipeline_mode<synchronous>, transform_indices = @transform_2, window_bounds = array<i64: 24, 1>}, {transform_indices = @transform_3, window_bounds = array<i64: 1, 24, 256>}]} {
    %c0 = arith.constant 0 : index
    %c0_0 = arith.constant 0 : index
    %c0_1 = arith.constant 0 : index
    %0 = vector.load %arg2[%c0, %c0_0, %c0_1] : memref<1x32x256xf32, #tpu.memory_space<vmem>>, vector<1x32x256xf32>
    %1 = vector.shape_cast %0 : vector<1x32x256xf32> to vector<32x256xf32>
    %c0_2 = arith.constant 0 : index
    %c0_3 = arith.constant 0 : index
    %2 = vector.load %arg3[%c0_2, %c0_3] : memref<24x32xf32, #tpu.memory_space<vmem>>, vector<24x32xf32>
    %cst = arith.constant dense<0.000000e+00> : vector<24x256xf32>
    %3 = tpu.matmul %2, %1, %cst {dimension_numbers = #tpu.dot_dimension_numbers<[1], [0], [0], [1], [0, 0, 1, 1], [], []>} : vector<24x32xf32>, vector<32x256xf32>, vector<24x256xf32> -> vector<24x256xf32>
    %c0_4 = arith.constant 0 : index
    %c0_5 = arith.constant 0 : index
    %4 = vector.load %arg4[%c0_4, %c0_5] : memref<24x1xf32, #tpu.memory_space<vmem>>, vector<24x1xf32>
    %5 = vector.broadcast %4 : vector<24x1xf32> to vector<24x256xf32>
    %6 = arith.addf %3, %5 : vector<24x256xf32>
    %c0_6 = arith.constant 0 : index
    %c0_7 = arith.constant 0 : index
    %c0_8 = arith.constant 0 : index
    %7 = vector.load %arg5[%c0_6, %c0_7, %c0_8] : memref<1x24x256xf32, #tpu.memory_space<vmem>>, vector<1x24x256xf32>
    %8 = vector.shape_cast %7 : vector<1x24x256xf32> to vector<24x256xf32>
    %9 = vector.shape_cast %6 : vector<24x256xf32> to vector<1x24x256xf32>
    tpu.vector_store %arg5[%c0_6, %c0_7, %c0_8], %9 {strides = array<i32>} : memref<1x24x256xf32, #tpu.memory_space<vmem>>, vector<1x24x256xf32>,
    return
  }
  func.func @transform_0(%arg0: i32, %arg1: i32) -> (i32, i32, i32) {
    %c0_i32 = arith.constant 0 : i32
    %c0_i32_0 = arith.constant 0 : i32
    return %arg0, %c0_i32, %arg1 : i32, i32, i32
  }
  func.func @transform_1(%arg0: i32, %arg1: i32) -> (i32, i32) {
    %c0_i32 = arith.constant 0 : i32
    %c0_i32_0 = arith.constant 0 : i32
    %c0_i32_1 = arith.constant 0 : i32
    return %c0_i32, %c0_i32_0 : i32, i32
  }
  func.func @transform_2(%arg0: i32, %arg1: i32) -> (i32, i32) {
    %c0_i32 = arith.constant 0 : i32
    %c0_i32_0 = arith.constant 0 : i32
    %c0_i32_1 = arith.constant 0 : i32
    return %c0_i32, %c0_i32_0 : i32, i32
  }
  func.func @transform_3(%arg0: i32, %arg1: i32) -> (i32, i32, i32) {
    %c0_i32 = arith.constant 0 : i32
    %c0_i32_0 = arith.constant 0 : i32
    return %arg0, %c0_i32, %arg1 : i32, i32, i32
  }
}

</mosaic_0001>

<llo_original>
// kernel: tpu_custom_call.1
$region0: #{tpu_custom_call.1}
  #allocation0 [shape = 'u32[]', space=smem, size = 0x4, offset = 0x4, fixed_abs, tag = 'smem constant byte address 0x4 - core index']
  #allocation1 [shape = 'u32[72,128]{1,0:T(1,128)}', space=vmem, size = 0x9000, scoped, tag = 'internal scratch']
  %s0 = inlined_call_operand.hbm [shape: f32[2,32,256], index: 0, kind: input, shape index: {}]
  %s1 = inlined_call_operand.vmem [shape: f32[24,32], index: 1, kind: input, shape index: {}]
  %s2 = inlined_call_operand.vmem [shape: f32[24,1], index: 2, kind: input, shape index: {}]
  %s3 = inlined_call_operand.hbm [shape: f32[2,24,256], index: 3, kind: output, shape index: {}]
  %s4 = sld [smem:[#allocation0]]
  $region49: #{tpu_custom_call.1} parent=0
    _
  %s6 = ssub.s32 1, %s4
  %s7 = scalar_select 0, %s6, %s4
  $region1: #{tpu_custom_call.1} parent=0
    #allocation2 [shape = 'u8[65536]{0}', space=vmem, size = 0x10000, scoped, tag = 'input window, operand 0']
    #allocation3 [shape = 's32[2]{0}', space=sflag, size = 0x8, scoped, tag = 'scoped memory for tpu_custom_call.1']
    #allocation4 [shape = 's32[2]{0}', space=sflag, size = 0x8, scoped, tag = 'scoped memory for tpu_custom_call.1']
    #allocation5 [shape = 'u8[49152]{0}', space=vmem, size = 0xc000, scoped, tag = 'output window, operand 0']
    %8 = vsyncpa [#allocation3], 0
    %s9 = scalar_lea.sflag [#allocation3], 1
    %10 = vsyncpa %s9, 0
    %11 = vsyncpa [#allocation4], 0
    %s12 = scalar_lea.sflag [#allocation4], 1
    %13 = vsyncpa %s12, 0
    loop: start=0, step=1, limit=4
    $region2: #{tpu_custom_call.1} parent=1 // loop_pre_header
      _
    $region3: #{tpu_custom_call.1} parent=1 // loop_header
      %s15 = sphi 0, %s19
      %p16 = scmp.ge.s32.totalorder %s15, 4
      %s22 = sphi 0, %s34
      %s23 = sphi 0, %s30
      %s24 = sphi 0, %s22
      %s25 = sphi 0, %s23
      %s26 = sphi 0, %s24
      %s27 = sphi 0, %s25
      %s39 = sphi 0, %s41
      %s42 = sphi 0, %s39
      %s43 = sphi 0, %s42
      %s59 = sphi 0, %s43
      %s63 = sphi 0, %s63
      %s65 = sphi 0, %s63
      %s66 = sphi 0, %s65
      %s80 = sphi 0, %s66
      %s84 = sphi 0, %s84
      %s86 = sphi 0, %s84
      %s87 = sphi 0, %s86
      %s101 = sphi 0, %s87
      %s109 = sphi 0, %s111
      %s112 = sphi 0, %s109
      %s113 = sphi 0, %s112
      %s129 = sphi 0, %s113
    $region4: #{tpu_custom_call.1} parent=1 // loop_header_branch
      %18 = sbr.rel (%p16) target = $region8
    $region5: #{tpu_custom_call.1} parent=1 // loop_body
      %s20 = ssub.s32 %s15, 1
      %s21 = ssub.s32 %s15, 2
      %s28 = sadd.s32 1, %s23
      %p29 = scmp.ge.s32.totalorder %s28, 1
      %s30 = scalar_select %p29, 0, %s28
      %s31 = sadd.s32 1, %s22
      %s32 = scalar_select %p29, %s31, %s22
      %p33 = scmp.ge.s32.totalorder %s32, 2
      %s34 = scalar_select %p33, 0, %s32
      %s35 = ssub.s32 %s22, %s34
      %s36 = ssub.s32 %s23, %s30
      %s37 = sor.u32 %s35, %s36
      %p38 = scmp.eq.s32.totalorder %s37, 0
      %s40 = sadd.s32 %s39, 1
      %s41 = scalar_select %p38, %s39, %s40
      %p44 = pneg %p38
      %p45 = scmp.eq.s32.totalorder %s15, 1
      %p46 = por %p44, %p45
      %p47 = scmp.ne.s32.totalorder %s39, %s42
      %p48 = scmp.eq.s32.totalorder %s15, 0
      %p49 = por %p47, %p48
      %p50 = scmp.ne.s32.totalorder %s39, %s42
      %p51 = scmp.eq.s32.totalorder %s20, 1
      %p52 = por %p50, %p51
      %p53 = scmp.ne.s32.totalorder %s42, %s43
      %p54 = scmp.eq.s32.totalorder %s20, 0
      %p55 = por %p53, %p54
      %p56 = scmp.ne.s32.totalorder %s42, %s43
      %p57 = scmp.eq.s32.totalorder %s21, 1
      %p58 = por %p56, %p57
      %p60 = scmp.ne.s32.totalorder %s43, %s59
      %p61 = scmp.eq.s32.totalorder %s21, 0
      %p62 = por %p60, %p61
      %s64 = sadd.s32 %s63, 1
      %p67 = scmp.eq.s32.totalorder %s15, 1
      %p68 = scmp.ne.s32.totalorder %s63, %s65
      %p69 = scmp.eq.s32.totalorder %s15, 0
      %p70 = por %p68, %p69
      %p71 = scmp.ne.s32.totalorder %s63, %s65
      %p72 = scmp.eq.s32.totalorder %s20, 1
      %p73 = por %p71, %p72
      %p74 = scmp.ne.s32.totalorder %s65, %s66
      %p75 = scmp.eq.s32.totalorder %s20, 0
      %p76 = por %p74, %p75
      %p77 = scmp.ne.s32.totalorder %s65, %s66
      %p78 = scmp.eq.s32.totalorder %s21, 1
      %p79 = por %p77, %p78
      %p81 = scmp.ne.s32.totalorder %s66, %s80
      %p82 = scmp.eq.s32.totalorder %s21, 0
      %p83 = por %p81, %p82
      %s85 = sadd.s32 %s84, 1
      %p88 = scmp.eq.s32.totalorder %s15, 1
      %p89 = scmp.ne.s32.totalorder %s84, %s86
      %p90 = scmp.eq.s32.totalorder %s15, 0
      %p91 = por %p89, %p90
      %p92 = scmp.ne.s32.totalorder %s84, %s86
      %p93 = scmp.eq.s32.totalorder %s20, 1
      %p94 = por %p92, %p93
      %p95 = scmp.ne.s32.totalorder %s86, %s87
      %p96 = scmp.eq.s32.totalorder %s20, 0
      %p97 = por %p95, %p96
      %p98 = scmp.ne.s32.totalorder %s86, %s87
      %p99 = scmp.eq.s32.totalorder %s21, 1
      %p100 = por %p98, %p99
      %p102 = scmp.ne.s32.totalorder %s87, %s101
      %p103 = scmp.eq.s32.totalorder %s21, 0
      %p104 = por %p102, %p103
      %s105 = ssub.s32 %s22, %s34
      %s106 = ssub.s32 %s23, %s30
      %s107 = sor.u32 %s105, %s106
      %p108 = scmp.eq.s32.totalorder %s107, 0
      %s110 = sadd.s32 %s109, 1
      %s111 = scalar_select %p108, %s109, %s110
      %p114 = pneg %p108
      %p115 = scmp.eq.s32.totalorder %s15, 1
      %p116 = por %p114, %p115
      %p117 = scmp.ne.s32.totalorder %s109, %s112
      %p118 = scmp.eq.s32.totalorder %s15, 0
      %p119 = por %p117, %p118
      %p120 = scmp.ne.s32.totalorder %s109, %s112
      %p121 = scmp.eq.s32.totalorder %s20, 1
      %p122 = por %p120, %p121
      %p123 = scmp.ne.s32.totalorder %s112, %s113
      %p124 = scmp.eq.s32.totalorder %s20, 0
      %p125 = por %p123, %p124
      %p126 = scmp.ne.s32.totalorder %s112, %s113
      %p127 = scmp.eq.s32.totalorder %s21, 1
      %p128 = por %p126, %p127
      %p130 = scmp.ne.s32.totalorder %s113, %s129
      %p131 = scmp.eq.s32.totalorder %s21, 0
      %p132 = por %p130, %p131
      %p133 = scmp.le.s32.totalorder 1, %s15
      %p134 = scmp.lt.s32.totalorder %s15, 3
      %p135 = pnand %p133, %p134
      %p136 = pneg %p135
      // Predicated region
      $region9: #{tpu_custom_call.1} parent=5 // pred_check
        _
      $region10: #{tpu_custom_call.1} parent=5 // pred_check_branch
        %138 = sbr.rel (%p135) target = $region12
      $region11: #{tpu_custom_call.1} parent=5 // pred_region
        %s139 = ssub.s32 %s15, 1
        // Predicated region
        $region13: #{tpu_custom_call.1} parent=11 // pred_check
          %p140 = pneg %p76
        $region14: #{tpu_custom_call.1} parent=11 // pred_check_branch
          %142 = sbr.rel (%p140) target = $region16
        $region15: #{tpu_custom_call.1} parent=11 // pred_region
          _
        $region16: #{tpu_custom_call.1} parent=11 // pred_fallthru
          _
        // Predicated region
        $region17: #{tpu_custom_call.1} parent=11 // pred_check
          %p143 = pneg %p97
        $region18: #{tpu_custom_call.1} parent=11 // pred_check_branch
          %145 = sbr.rel (%p143) target = $region20
        $region19: #{tpu_custom_call.1} parent=11 // pred_region
          _
        $region20: #{tpu_custom_call.1} parent=11 // pred_fallthru
          _
      $region12: #{tpu_custom_call.1} parent=5 // pred_fallthru
        _
      %p146 = scmp.lt.s32.totalorder %s15, 2
      // Predicated region
      $region21: #{tpu_custom_call.1} parent=5 // pred_check
        %p147 = pneg %p146
      $region22: #{tpu_custom_call.1} parent=5 // pred_check_branch
        %149 = sbr.rel (%p147) target = $region24
      $region23: #{tpu_custom_call.1} parent=5 // pred_region
        // Predicated region
        $region25: #{tpu_custom_call.1} parent=23 // pred_check
          %p150 = pneg %p49
        $region26: #{tpu_custom_call.1} parent=23 // pred_check_branch
          %152 = sbr.rel (%p150) target = $region28
        $region27: #{tpu_custom_call.1} parent=23 // pred_region
          %s153 = sand.u32 %s39, 1
          %s154 = scalar_lea.sflag [#allocation3], %s153
          %s155 = sand.u32 %s39, 1
          %s156 = smul.addr %s155, 64
          %s157 = scalar_lea.vmem [#allocation2], %s156
          %s158 = smul.u32 2, %s23
          %160 = vsyncadd %s154, 0
          %s161 = smul.addr %s22, 8
          %s162 = sadd.s32 %s158, %s161
          %s163 = smul.addr %s162, 8
          %s164 = scalar_lea.hbm %s0, %s163
          %s165 = sshll.u32 %s164, 4
          %s166 = int_to_ptr.hbm [resolvable:$true] %s165
          %s167 = sshll.u32 %s157, 4
          %s168 = int_to_ptr.vmem [resolvable:$true] %s167
          %173 = dma.hbm_to_vmem [thread:$0]  %s166, 1024, %s168, %s154, 256, 256, 16
        $region28: #{tpu_custom_call.1} parent=23 // pred_fallthru
          _
      $region24: #{tpu_custom_call.1} parent=5 // pred_fallthru
        _
      %p174 = scmp.le.s32.totalorder 1, %s15
      %p175 = scmp.lt.s32.totalorder %s15, 3
      %p176 = pnand %p174, %p175
      %p177 = pneg %p176
      // Predicated region
      $region29: #{tpu_custom_call.1} parent=5 // pred_check
        _
      $region30: #{tpu_custom_call.1} parent=5 // pred_check_branch
        %179 = sbr.rel (%p176) target = $region32
      $region31: #{tpu_custom_call.1} parent=5 // pred_region
        %s180 = ssub.s32 %s15, 1
        %s181 = sand.u32 %s42, 1
        %s182 = scalar_lea.sflag [#allocation3], %s181
        %s183 = sand.u32 %s42, 1
        %s184 = smul.addr %s183, 64
        %s185 = scalar_lea.vmem [#allocation2], %s184
        // Predicated region
        $region33: #{tpu_custom_call.1} parent=31 // pred_check
          %p186 = pneg %p55
        $region34: #{tpu_custom_call.1} parent=31 // pred_check_branch
          %188 = sbr.rel (%p186) target = $region36
        $region35: #{tpu_custom_call.1} parent=31 // pred_region
          %190 = dma.done %s182, 1024
        $region36: #{tpu_custom_call.1} parent=31 // pred_fallthru
          _
        %s191 = sand.u32 %s42, 1
        %s192 = scalar_lea.sflag [#allocation3], %s191
        %s193 = sand.u32 %s42, 1
        %s194 = smul.addr %s193, 64
        %s195 = scalar_lea.vmem [#allocation2], %s194
        %p196 = pneg %p55
        %p197 = pneg %p52
        %p198 = pneg %p76
        %p199 = pneg %p73
        %p200 = pneg %p97
        %p201 = pneg %p94
        %p202 = pneg %p125
        %p203 = pneg %p122
        %s204 = sand.u32 %s112, 1
        %s205 = scalar_lea.sflag [#allocation4], %s204
        %s206 = sand.u32 %s112, 1
        %s207 = smul.addr %s206, 48
        %s208 = scalar_lea.vmem [#allocation5], %s207
        %s209 = smul.u32 2, %s25
        %s210 = smul.u32 2, %s25
        %v211 = vld [vmem:[%s185] sm:$0xff]
        %v212 = vld [vmem:[%s185 + $0x8] sm:$0xff]
        %v213 = vld [vmem:[%s185 + $0x10] sm:$0xff]
        %v214 = vld [vmem:[%s185 + $0x18] sm:$0xff]
        %v215 = vld [vmem:[%s185 + $0x20] sm:$0xff]
        %v216 = vld [vmem:[%s185 + $0x28] sm:$0xff]
        %v217 = vld [vmem:[%s185 + $0x30] sm:$0xff]
        %v218 = vld [vmem:[%s185 + $0x38] sm:$0xff]
        %v219 = vld [vmem:[%s1] sm:$0xff]
        %v220 = vld [vmem:[%s1 + $0x8] sm:$0xff]
        %v221 = vld [vmem:[%s1 + $0x10] sm:$0xff]
        %v222 = vld [vmem:[%s2] sm:$0xff]
        %v223 = vld [vmem:[%s2 + $0x8] sm:$0xff]
        %v224 = vld [vmem:[%s2 + $0x10] sm:$0xff]
        %226 = vset.pattern.permute.xlu0 0
        %227 = vperm.xlu0 %226, %v222
        %v228 = vpop.permute.xlu0 %227
        %231 = vset.pattern.permute.xlu0 0
        %232 = vperm.xlu0 %231, %v223
        %v233 = vpop.permute.xlu0 %232
        %236 = vset.pattern.permute.xlu0 0
        %237 = vperm.xlu0 %236, %v224
        %v238 = vpop.permute.xlu0 %237
        %vm240 = vcmask 261120
        %v242 = vsel %vm240, %v219, 0
        %v245 = vsel %vm240, %v220, 0
        %v248 = vsel %vm240, %v221, 0
        %250 = vmatpush.msra.mxu0 0.0
        %251 = vmatpush.msra.mxu0 0.0
        %252 = vmatpush.msra.mxu0 0.0
        %253 = vmatpush.msra.mxu0 0.0
        %254 = vmatpush.msra.mxu0 0.0
        %255 = vmatpush.msra.mxu0 0.0
        %256 = vmatpush.msra.mxu0 0.0
        %257 = vmatpush.msra.mxu0 0.0
        %258 = vmatpush.msra.mxu0 0.0
        %259 = vmatpush.msra.mxu0 0.0
        %260 = vmatpush.msra.mxu0 0.0
        %261 = vmatpush.msra.mxu0 0.0
        %262 = vmatpush.msra.mxu0 %v217
        %263 = vmatpush.msra.mxu0 %v215
        %264 = vmatpush.msra.mxu0 %v213
        %265 = vmatpush.msra.mxu0 %v211
        %266 = vmatmul.f32.gmra.mxu0 %v242
        %v267 = vpop.f32.mrf.mxu0
        %v268 = vadd.f32 %v228, %v267
        %269 = vmatmul.f32.gmra.mxu0 %v245
        %v270 = vpop.f32.mrf.mxu0
        %v271 = vadd.f32 %v233, %v270
        %272 = vmatmul.f32.gmra.mxu0 %v248
        %v273 = vpop.f32.mrf.mxu0
        %v274 = vadd.f32 %v238, %v273
        %275 = vdwg.mxu0
        %276 = vmatpush.msra.mxu0 0.0
        %277 = vmatpush.msra.mxu0 0.0
        %278 = vmatpush.msra.mxu0 0.0
        %279 = vmatpush.msra.mxu0 0.0
        %280 = vmatpush.msra.mxu0 0.0
        %281 = vmatpush.msra.mxu0 0.0
        %282 = vmatpush.msra.mxu0 0.0
        %283 = vmatpush.msra.mxu0 0.0
        %284 = vmatpush.msra.mxu0 0.0
        %285 = vmatpush.msra.mxu0 0.0
        %286 = vmatpush.msra.mxu0 0.0
        %287 = vmatpush.msra.mxu0 0.0
        %288 = vmatpush.msra.mxu0 %v218
        %289 = vmatpush.msra.mxu0 %v216
        %290 = vmatpush.msra.mxu0 %v214
        %291 = vmatpush.msra.mxu0 %v212
        %292 = vmatmul.f32.gmra.mxu0 %v242
        %v293 = vpop.f32.mrf.mxu0
        %v294 = vadd.f32 %v228, %v293
        %295 = vmatmul.f32.gmra.mxu0 %v245
        %v296 = vpop.f32.mrf.mxu0
        %v297 = vadd.f32 %v233, %v296
        %298 = vmatmul.f32.gmra.mxu0 %v248
        %v299 = vpop.f32.mrf.mxu0
        %v300 = vadd.f32 %v238, %v299
        %301 = vdwg.mxu0
        %302 = vst [vmem:[%s208] sm:$0xff] %v268
        %303 = vst [vmem:[%s208 + $0x8] sm:$0xff] %v294
        %304 = vst [vmem:[%s208 + $0x10] sm:$0xff] %v271
        %305 = vst [vmem:[%s208 + $0x18] sm:$0xff] %v297
        %306 = vst [vmem:[%s208 + $0x20] sm:$0xff] %v274
        %307 = vst [vmem:[%s208 + $0x28] sm:$0xff] %v300
        %s308 = sand.u32 %s112, 1
        %s309 = scalar_lea.sflag [#allocation4], %s308
        %s310 = sand.u32 %s112, 1
        %s311 = smul.addr %s310, 48
        %s312 = scalar_lea.vmem [#allocation5], %s311
        // Predicated region
        $region37: #{tpu_custom_call.1} parent=31 // pred_check
          %p313 = pneg %p122
        $region38: #{tpu_custom_call.1} parent=31 // pred_check_branch
          %315 = sbr.rel (%p313) target = $region40
        $region39: #{tpu_custom_call.1} parent=31 // pred_region
          %s316 = smul.u32 2, %s25
          %318 = vsyncadd %s309, 0
          %s319 = smul.addr %s24, 6
          %s320 = sadd.s32 %s316, %s319
          %s321 = smul.addr %s320, 8
          %s322 = scalar_lea.hbm %s3, %s321
          %s323 = sshll.u32 %s312, 4
          %s324 = int_to_ptr.vmem [resolvable:$true] %s323
          %s325 = sshll.u32 %s322, 4
          %s326 = int_to_ptr.hbm [resolvable:$true] %s325
          %331 = dma.vmem_to_hbm [thread:$0]  %s324, 768, %s326, %s309, 256, 256, 16
        $region40: #{tpu_custom_call.1} parent=31 // pred_fallthru
          _
      $region32: #{tpu_custom_call.1} parent=5 // pred_fallthru
        _
      %p332 = scmp.le.s32.totalorder 2, %s15
      // Predicated region
      $region41: #{tpu_custom_call.1} parent=5 // pred_check
        %p333 = pneg %p332
      $region42: #{tpu_custom_call.1} parent=5 // pred_check_branch
        %335 = sbr.rel (%p333) target = $region44
      $region43: #{tpu_custom_call.1} parent=5 // pred_region
        %s336 = ssub.s32 %s15, 2
        // Predicated region
        $region45: #{tpu_custom_call.1} parent=43 // pred_check
          %p337 = pneg %p128
        $region46: #{tpu_custom_call.1} parent=43 // pred_check_branch
          %339 = sbr.rel (%p337) target = $region48
        $region47: #{tpu_custom_call.1} parent=43 // pred_region
          %s340 = sand.u32 %s113, 1
          %s341 = scalar_lea.sflag [#allocation4], %s340
          %s342 = sand.u32 %s113, 1
          %s343 = smul.addr %s342, 48
          %s344 = scalar_lea.vmem [#allocation5], %s343
          %346 = dma.done %s341, 768
        $region48: #{tpu_custom_call.1} parent=43 // pred_fallthru
          _
      $region44: #{tpu_custom_call.1} parent=5 // pred_fallthru
        _
    $region6: #{tpu_custom_call.1} parent=1 // loop_footer
      %s19 = sadd.s32 1, %s15
    $region7: #{tpu_custom_call.1} parent=1 // loop_footer_branch
      %14 = sbr.rel target = $region3
    $region8: #{tpu_custom_call.1} parent=1 // loop_exit
      _
    %347 = vsyncpa [#allocation3], 1
    %s348 = scalar_lea.sflag [#allocation3], 1
    %349 = vsyncpa %s348, 1
    %350 = vsyncpa [#allocation4], 1
    %s351 = scalar_lea.sflag [#allocation4], 1
    %352 = vsyncpa %s351, 1

</llo_original>
